<compile_context>
chip_gen: v7x
topology: tpu7x:2x2x1
jax: 0.10.0
libtpu: 0.0.40
codegen_flags: <defaults>
</compile_context>

<pallas_src>
import jax
import jax.numpy as jnp
from jax.experimental import pallas as pl
from jax.experimental.pallas import tpu as pltpu

IN_FEATS = 14 * 14   # 196
H = 256              # hidden width
N_OUT = 10           # true logits
N_PAD = 128          # lane-dense padded output width (sliced back to 10 in the wrapper)
TB_MAX = 1024        # max batch tile


def _mlp_kernel(x_ref, w1_ref, b1_ref, w2_ref, b2_ref, w3_ref, b3_ref, o_ref):
    # x arrives as raw f32 (TB, 196); cast to bf16 in-kernel right before the MXU dot.
    x = x_ref[...].astype(jnp.bfloat16)
    # Layer 1: bf16 MXU matmul, f32 accumulate, f32 bias + ReLU (f32 epilogue is safe on v5e too).
    h = jnp.dot(x, w1_ref[...], preferred_element_type=jnp.float32)
    h = jnp.maximum(h + b1_ref[...], 0.0)
    # Layer 2
    h = jnp.dot(h.astype(jnp.bfloat16), w2_ref[...], preferred_element_type=jnp.float32)
    h = jnp.maximum(h + b2_ref[...], 0.0)
    # Layer 3 (output lanes padded to 128 for unmasked lane-dense stores)
    h = jnp.dot(h.astype(jnp.bfloat16), w3_ref[...], preferred_element_type=jnp.float32)
    o_ref[...] = jnp.maximum(h + b3_ref[...], 0.0).astype(o_ref.dtype)


def _round_up(n, m):
    return (n + m - 1) // m * m


def seq_neural_network_forward(x, params):
    """x: (B, 14, 14) float32. Returns (B, 10) float32 (post-ReLU, as in the PyTorch spec)."""
    w1, b1, w2, b2, w3, b3 = params
    B = x.shape[0]

    # Flatten only; no pad/cast of x in HBM.
    x_flat = x.reshape(B, IN_FEATS)

    # Batch tile: multiple of 16 (bf16 sublane packing), at least 2 grid steps when B allows
    # (so v7x can shard the "parallel" batch axis over its 2 TensorCores), capped at TB_MAX,
    # and never wildly larger than B itself.
    TB = min(TB_MAX, max(8, _round_up(pl.cdiv(B, 2), 16)), _round_up(B, 8))
    grid = (pl.cdiv(B, TB),)   # ragged last block: rows independent, OOB output stores masked

    # Tiny one-time weight casts; weights/biases stay VMEM-resident across all grid steps.
    w1_b = w1.astype(jnp.bfloat16)                                          # (196, 256)
    w2_b = w2.astype(jnp.bfloat16)                                          # (256, 256)
    w3_b = jnp.pad(w3, ((0, 0), (0, N_PAD - N_OUT))).astype(jnp.bfloat16)   # (256, 128)
    b1_b = b1.reshape(1, H).astype(jnp.float32)
    b2_b = b2.reshape(1, H).astype(jnp.float32)
    b3_b = jnp.pad(b3.reshape(1, N_OUT), ((0, 0), (0, N_PAD - N_OUT))).astype(jnp.float32)

    def const_spec(shape):
        # Full-block spec with a constant block index -> fetched once, VMEM-resident.
        return pl.BlockSpec(shape, lambda i: (0,) * len(shape))

    flops = 2 * B * (IN_FEATS * H + H * H + H * N_PAD)
    bytes_accessed = (x_flat.size * 4
                      + (w1_b.size + w2_b.size + w3_b.size) * 2
                      + (b1_b.size + b2_b.size + b3_b.size) * 4
                      + B * N_PAD * 4)

    out_p = pl.pallas_call(
        _mlp_kernel,
        out_shape=jax.ShapeDtypeStruct((B, N_PAD), jnp.float32),
        grid=grid,
        in_specs=[
            pl.BlockSpec((TB, IN_FEATS), lambda i: (i, 0)),   # x tile (f32, pipelined over batch)
            const_spec((IN_FEATS, H)),                        # w1 (196 = full array dim -> legal)
            const_spec((1, H)),                               # b1
            const_spec((H, H)),                               # w2
            const_spec((1, H)),                               # b2
            const_spec((H, N_PAD)),                           # w3
            const_spec((1, N_PAD)),                           # b3
        ],
        out_specs=pl.BlockSpec((TB, N_PAD), lambda i: (i, 0)),
        compiler_params=pltpu.CompilerParams(
            dimension_semantics=("parallel",),                # batch tiles shard over v7x's 2 TCs
        ),
        cost_estimate=pl.CostEstimate(
            flops=flops, transcendentals=0, bytes_accessed=bytes_accessed),
    )(x_flat, w1_b, b1_b, w2_b, b2_b, w3_b, b3_b)

    # Slice off the lane padding; fuses away under jit.
    return out_p[:, :N_OUT]


def init_params(key):
    """PyTorch nn.Linear-style init (uniform +-1/sqrt(fan_in)).
    Weights stored as (in_features, out_features); biases as (1, out_features)."""
    def linear(key, fan_in, fan_out):
        kw, kb = jax.random.split(key)
        bound = 1.0 / jnp.sqrt(fan_in)
        w = jax.random.uniform(kw, (fan_in, fan_out), jnp.float32, -bound, bound)
        b = jax.random.uniform(kb, (1, fan_out), jnp.float32, -bound, bound)
        return w, b

    k1, k2, k3 = jax.random.split(key, 3)
    w1, b1 = linear(k1, IN_FEATS, H)
    w2, b2 = linear(k2, H, H)
    w3, b3 = linear(k3, H, N_OUT)
    return (w1, b1, w2, b2, w3, b3)


def _ref_forward_bf16(x, params):
    """Pure-JAX reference mirroring the kernel's bf16-input / f32-accumulate numerics."""
    w1, b1, w2, b2, w3, b3 = params
    bf = jnp.bfloat16
    h = x.reshape(x.shape[0], -1)
    h = jnp.dot(h.astype(bf), w1.astype(bf), preferred_element_type=jnp.float32) + b1
    h = jnp.maximum(h, 0.0)
    h = jnp.dot(h.astype(bf), w2.astype(bf), preferred_element_type=jnp.float32) + b2
    h = jnp.maximum(h, 0.0)
    h = jnp.dot(h.astype(bf), w3.astype(bf), preferred_element_type=jnp.float32) + b3
    return jnp.maximum(h, 0.0)


def _ref_forward_f32(x, params):
    w1, b1, w2, b2, w3, b3 = params
    h = x.reshape(x.shape[0], -1)
    h = jnp.maximum(h @ w1 + b1, 0.0)
    h = jnp.maximum(h @ w2 + b2, 0.0)
    return jnp.maximum(h @ w3 + b3, 0.0)


if __name__ == "__main__":
    key = jax.random.PRNGKey(0)
    k_x, k_p = jax.random.split(key)

    B = 2
    x = jax.random.normal(k_x, (B, 14, 14), dtype=jnp.float32)
    params = init_params(k_p)

    fwd = jax.jit(seq_neural_network_forward)
    out = fwd(x, params)
    jax.block_until_ready(out)
    assert out.shape == (B, N_OUT)

    # Tight check vs a reference using the same bf16-in / f32-acc matmul numerics.
    ref_bf16 = _ref_forward_bf16(x, params)
    assert jnp.allclose(out, ref_bf16, atol=1e-3, rtol=1e-2), "mismatch vs bf16 reference"

    # Loose check vs the full-f32 PyTorch-equivalent forward (bf16 quantization error only).
    ref_f32 = _ref_forward_f32(x, params)
    assert jnp.allclose(out, ref_f32, atol=5e-2, rtol=5e-2), "mismatch vs f32 reference"

    print("KERNEL_OK")
</pallas_src>

<mosaic_0001>
module attributes {stable_mosaic.version = 11 : i64} {
  func.func @_mlp_kernel(%arg0: i32, %arg1: memref<8x196xf32, #tpu.memory_space<vmem>>, %arg2: memref<196x256xbf16, #tpu.memory_space<vmem>>, %arg3: memref<1x256xf32, #tpu.memory_space<vmem>>, %arg4: memref<256x256xbf16, #tpu.memory_space<vmem>>, %arg5: memref<1x256xf32, #tpu.memory_space<vmem>>, %arg6: memref<256x128xbf16, #tpu.memory_space<vmem>>, %arg7: memref<1x128xf32, #tpu.memory_space<vmem>>, %arg8: memref<8x128xf32, #tpu.memory_space<vmem>>) attributes {dimension_semantics = [#tpu.dimension_semantics<parallel>], iteration_bounds = array<i64: 1>, scalar_prefetch = 0 : i64, scratch_operands = 0 : i64, tpu.core_type = #tpu.core_type<tc>, window_params = [{transform_indices = @transform_0, window_bounds = array<i64: 8, 196>}, {pipeline_mode = #tpu.pipeline_mode<synchronous>, transform_indices = @transform_1, window_bounds = array<i64: 196, 256>}, {pipeline_mode = #tpu.pipeline_mode<synchronous>, transform_indices = @transform_2, window_bounds = array<i64: 1, 256>}, {pipeline_mode = #tpu.pipeline_mode<synchronous>, transform_indices = @transform_3, window_bounds = array<i64: 256, 256>}, {pipeline_mode = #tpu.pipeline_mode<synchronous>, transform_indices = @transform_4, window_bounds = array<i64: 1, 256>}, {pipeline_mode = #tpu.pipeline_mode<synchronous>, transform_indices = @transform_5, window_bounds = array<i64: 256, 128>}, {pipeline_mode = #tpu.pipeline_mode<synchronous>, transform_indices = @transform_6, window_bounds = array<i64: 1, 128>}, {transform_indices = @transform_7, window_bounds = array<i64: 8, 128>}]} {
    %c0 = arith.constant 0 : index
    %c0_0 = arith.constant 0 : index
    %0 = vector.load %arg1[%c0, %c0_0] : memref<8x196xf32, #tpu.memory_space<vmem>>, vector<8x196xf32>
    %1 = arith.truncf %0 : vector<8x196xf32> to vector<8x196xbf16>
    %c0_1 = arith.constant 0 : index
    %c0_2 = arith.constant 0 : index
    %2 = vector.load %arg2[%c0_1, %c0_2] : memref<196x256xbf16, #tpu.memory_space<vmem>>, vector<196x256xbf16>
    %cst = arith.constant dense<0.000000e+00> : vector<8x256xf32>
    %3 = tpu.matmul %1, %2, %cst {dimension_numbers = #tpu.dot_dimension_numbers<[1], [0], [0], [1], [0, 0, 1, 1], [], []>} : vector<8x196xbf16>, vector<196x256xbf16>, vector<8x256xf32> -> vector<8x256xf32>
    %c0_3 = arith.constant 0 : index
    %c0_4 = arith.constant 0 : index
    %4 = vector.load %arg3[%c0_3, %c0_4] : memref<1x256xf32, #tpu.memory_space<vmem>>, vector<1x256xf32>
    %5 = vector.broadcast %4 : vector<1x256xf32> to vector<8x256xf32>
    %6 = arith.addf %3, %5 : vector<8x256xf32>
    %cst_5 = arith.constant 0.000000e+00 : f32
    %7 = vector.broadcast %cst_5 : f32 to vector<8x256xf32>
    %8 = arith.maximumf %6, %7 : vector<8x256xf32>
    %9 = arith.truncf %8 : vector<8x256xf32> to vector<8x256xbf16>
    %c0_6 = arith.constant 0 : index
    %c0_7 = arith.constant 0 : index
    %10 = vector.load %arg4[%c0_6, %c0_7] : memref<256x256xbf16, #tpu.memory_space<vmem>>, vector<256x256xbf16>
    %cst_8 = arith.constant dense<0.000000e+00> : vector<8x256xf32>
    %11 = tpu.matmul %9, %10, %cst_8 {dimension_numbers = #tpu.dot_dimension_numbers<[1], [0], [0], [1], [0, 0, 1, 1], [], []>} : vector<8x256xbf16>, vector<256x256xbf16>, vector<8x256xf32> -> vector<8x256xf32>
    %c0_9 = arith.constant 0 : index
    %c0_10 = arith.constant 0 : index
    %12 = vector.load %arg5[%c0_9, %c0_10] : memref<1x256xf32, #tpu.memory_space<vmem>>, vector<1x256xf32>
    %13 = vector.broadcast %12 : vector<1x256xf32> to vector<8x256xf32>
    %14 = arith.addf %11, %13 : vector<8x256xf32>
    %cst_11 = arith.constant 0.000000e+00 : f32
    %15 = vector.broadcast %cst_11 : f32 to vector<8x256xf32>
    %16 = arith.maximumf %14, %15 : vector<8x256xf32>
    %17 = arith.truncf %16 : vector<8x256xf32> to vector<8x256xbf16>
    %c0_12 = arith.constant 0 : index
    %c0_13 = arith.constant 0 : index
    %18 = vector.load %arg6[%c0_12, %c0_13] : memref<256x128xbf16, #tpu.memory_space<vmem>>, vector<256x128xbf16>
    %cst_14 = arith.constant dense<0.000000e+00> : vector<8x128xf32>
    %19 = tpu.matmul %17, %18, %cst_14 {dimension_numbers = #tpu.dot_dimension_numbers<[1], [0], [0], [1], [0, 0, 1, 1], [], []>} : vector<8x256xbf16>, vector<256x128xbf16>, vector<8x128xf32> -> vector<8x128xf32>
    %c0_15 = arith.constant 0 : index
    %c0_16 = arith.constant 0 : index
    %20 = vector.load %arg7[%c0_15, %c0_16] : memref<1x128xf32, #tpu.memory_space<vmem>>, vector<1x128xf32>
    %21 = vector.broadcast %20 : vector<1x128xf32> to vector<8x128xf32>
    %22 = arith.addf %19, %21 : vector<8x128xf32>
    %cst_17 = arith.constant 0.000000e+00 : f32
    %23 = vector.broadcast %cst_17 : f32 to vector<8x128xf32>
    %24 = arith.maximumf %22, %23 : vector<8x128xf32>
    %c0_18 = arith.constant 0 : index
    %c0_19 = arith.constant 0 : index
    %25 = vector.load %arg8[%c0_18, %c0_19] : memref<8x128xf32, #tpu.memory_space<vmem>>, vector<8x128xf32>
    tpu.vector_store %arg8[%c0_18, %c0_19], %24 {strides = array<i32>} : memref<8x128xf32, #tpu.memory_space<vmem>>, vector<8x128xf32>,
    return
  }
  func.func @transform_0(%arg0: i32) -> (i32, i32) {
    %c0_i32 = arith.constant 0 : i32
    %c0_i32_0 = arith.constant 0 : i32
    return %arg0, %c0_i32 : i32, i32
  }
  func.func @transform_1(%arg0: i32) -> (i32, i32) {
    %c0_i32 = arith.constant 0 : i32
    %c0_i32_0 = arith.constant 0 : i32
    %c0_i32_1 = arith.constant 0 : i32
    return %c0_i32, %c0_i32_0 : i32, i32
  }
  func.func @transform_2(%arg0: i32) -> (i32, i32) {
    %c0_i32 = arith.constant 0 : i32
    %c0_i32_0 = arith.constant 0 : i32
    %c0_i32_1 = arith.constant 0 : i32
    return %c0_i32, %c0_i32_0 : i32, i32
  }
  func.func @transform_3(%arg0: i32) -> (i32, i32) {
    %c0_i32 = arith.constant 0 : i32
    %c0_i32_0 = arith.constant 0 : i32
    %c0_i32_1 = arith.constant 0 : i32
    return %c0_i32, %c0_i32_0 : i32, i32
  }
  func.func @transform_4(%arg0: i32) -> (i32, i32) {
    %c0_i32 = arith.constant 0 : i32
    %c0_i32_0 = arith.constant 0 : i32
    %c0_i32_1 = arith.constant 0 : i32
    return %c0_i32, %c0_i32_0 : i32, i32
  }
  func.func @transform_5(%arg0: i32) -> (i32, i32) {
    %c0_i32 = arith.constant 0 : i32
    %c0_i32_0 = arith.constant 0 : i32
    %c0_i32_1 = arith.constant 0 : i32
    return %c0_i32, %c0_i32_0 : i32, i32
  }
  func.func @transform_6(%arg0: i32) -> (i32, i32) {
    %c0_i32 = arith.constant 0 : i32
    %c0_i32_0 = arith.constant 0 : i32
    %c0_i32_1 = arith.constant 0 : i32
    return %c0_i32, %c0_i32_0 : i32, i32
  }
  func.func @transform_7(%arg0: i32) -> (i32, i32) {
    %c0_i32 = arith.constant 0 : i32
    %c0_i32_0 = arith.constant 0 : i32
    return %arg0, %c0_i32 : i32, i32
  }
}

</mosaic_0001>

<llo_original>
// kernel: seq_neural_network_forward.1
$region0: #{seq_neural_network_forward.1}
  #allocation0 [shape = 'u32[]', space=smem, size = 0x4, offset = 0x4, fixed_abs, tag = 'smem constant byte address 0x4 - core index']
  #allocation1 [shape = 'u32[144,128]{1,0:T(1,128)}', space=vmem, size = 0x12000, scoped, tag = 'internal scratch']
  %s0 = inlined_call_operand.vmem [shape: f32[2,196], index: 0, kind: input, shape index: {}]
  %s1 = inlined_call_operand.vmem [shape: bf16[196,256], index: 1, kind: input, shape index: {}]
  %s2 = inlined_call_operand.vmem [shape: f32[1,256], index: 2, kind: input, shape index: {}]
  %s3 = inlined_call_operand.vmem [shape: bf16[256,256], index: 3, kind: input, shape index: {}]
  %s4 = inlined_call_operand.vmem [shape: f32[1,256], index: 4, kind: input, shape index: {}]
  %s5 = inlined_call_operand.vmem [shape: bf16[256,128], index: 5, kind: input, shape index: {}]
  %s6 = inlined_call_operand.vmem [shape: f32[1,128], index: 6, kind: input, shape index: {}]
  %s7 = inlined_call_operand.hbm [shape: f32[2,128], index: 7, kind: output, shape index: {}]
  %s8 = sld [smem:[#allocation0]]
  $region38: #{seq_neural_network_forward.1} parent=0
    _
  %s10 = ssub.s32 1, %s8
  %s11 = scalar_select 0, %s10, %s8
  $region1: #{seq_neural_network_forward.1} parent=0
    #allocation2 [shape = 'u8[4096]{0}', space=vmem, size = 0x1000, scoped, tag = 'output window, operand 0, single buffered']
    #allocation3 [shape = 's32[1]{0}', space=sflag, size = 0x4, scoped, tag = 'scoped memory for seq_neural_network_forward.1']
    %12 = vsyncpa [#allocation3], 0
    // Predicated region
    $region2: #{seq_neural_network_forward.1} parent=1 // pred_check
      _
    $region3: #{seq_neural_network_forward.1} parent=1 // pred_check_branch
      %14 = sbr.rel (0) target = $region5
    $region4: #{seq_neural_network_forward.1} parent=1 // pred_region
      _
    $region5: #{seq_neural_network_forward.1} parent=1 // pred_fallthru
      _
    // Predicated region
    $region6: #{seq_neural_network_forward.1} parent=1 // pred_check
      _
    $region7: #{seq_neural_network_forward.1} parent=1 // pred_check_branch
      %16 = sbr.rel (0) target = $region9
    $region8: #{seq_neural_network_forward.1} parent=1 // pred_region
      _
    $region9: #{seq_neural_network_forward.1} parent=1 // pred_fallthru
      _
    // Predicated region
    $region10: #{seq_neural_network_forward.1} parent=1 // pred_check
      _
    $region11: #{seq_neural_network_forward.1} parent=1 // pred_check_branch
      %18 = sbr.rel (0) target = $region13
    $region12: #{seq_neural_network_forward.1} parent=1 // pred_region
      _
    $region13: #{seq_neural_network_forward.1} parent=1 // pred_fallthru
      _
    // Predicated region
    $region14: #{seq_neural_network_forward.1} parent=1 // pred_check
      _
    $region15: #{seq_neural_network_forward.1} parent=1 // pred_check_branch
      %20 = sbr.rel (0) target = $region17
    $region16: #{seq_neural_network_forward.1} parent=1 // pred_region
      _
    $region17: #{seq_neural_network_forward.1} parent=1 // pred_fallthru
      _
    // Predicated region
    $region18: #{seq_neural_network_forward.1} parent=1 // pred_check
      _
    $region19: #{seq_neural_network_forward.1} parent=1 // pred_check_branch
      %22 = sbr.rel (0) target = $region21
    $region20: #{seq_neural_network_forward.1} parent=1 // pred_region
      _
    $region21: #{seq_neural_network_forward.1} parent=1 // pred_fallthru
      _
    // Predicated region
    $region22: #{seq_neural_network_forward.1} parent=1 // pred_check
      _
    $region23: #{seq_neural_network_forward.1} parent=1 // pred_check_branch
      %24 = sbr.rel (0) target = $region25
    $region24: #{seq_neural_network_forward.1} parent=1 // pred_region
      _
    $region25: #{seq_neural_network_forward.1} parent=1 // pred_fallthru
      _
    // Predicated region
    $region26: #{seq_neural_network_forward.1} parent=1 // pred_check
      _
    $region27: #{seq_neural_network_forward.1} parent=1 // pred_check_branch
      %26 = sbr.rel (0) target = $region29
    $region28: #{seq_neural_network_forward.1} parent=1 // pred_region
      _
    $region29: #{seq_neural_network_forward.1} parent=1 // pred_fallthru
      _
    %v28 = vld [vmem:[%s0] sm:$0xf]
    %v29 = vld [vmem:[%s0 + $0x4] sm:$0xf]
    %v30 = vld [vmem:[%s0 + $0x8] sm:$0xf]
    %v31 = vld [vmem:[%s0 + $0xc] sm:$0xf]
    %v36 = vcombine.low %v28, %v29
    %v37 = vcombine.low %v30, %v31
    %v39 = vunpack.c.l.s4 1983009808
    %v40 = vunpack.c.0.s8 %v39
    %v41 = vlaneseq
    %v42 = vshrl.u32 %v41, 7
    %v43 = vsub.s32 %v40, %v42
    %v44 = vrot.slane %v36, %v43
    %v46 = vunpack.c.l.s4 1983009808
    %v47 = vunpack.c.0.s8 %v46
    %v48 = vlaneseq
    %v49 = vshrl.u32 %v48, 7
    %v50 = vsub.s32 %v47, %v49
    %v51 = vrot.slane %v37, %v50
    %v52 = vcombine.low %v44, %v51
    %v53 = vcombine.high %v44, %v51
    %v56 = vpack.c.bf16 %v52, %v52
    %v57 = vpack.c.bf16 %v53, %v53
    %v58 = vld [vmem:[%s1] sm:$0xff]
    %v59 = vld [vmem:[%s1 + $0x8] sm:$0xff]
    %v60 = vld [vmem:[%s1 + $0x10] sm:$0xff]
    %v61 = vld [vmem:[%s1 + $0x18] sm:$0xff]
    %v62 = vld [vmem:[%s1 + $0x20] sm:$0xff]
    %v63 = vld [vmem:[%s1 + $0x28] sm:$0xff]
    %v64 = vld [vmem:[%s1 + $0x30] sm:$0xff]
    %v65 = vld [vmem:[%s1 + $0x38] sm:$0xff]
    %v66 = vld [vmem:[%s1 + $0x40] sm:$0xff]
    %v67 = vld [vmem:[%s1 + $0x48] sm:$0xff]
    %v68 = vld [vmem:[%s1 + $0x50] sm:$0xff]
    %v69 = vld [vmem:[%s1 + $0x58] sm:$0xff]
    %v70 = vld [vmem:[%s1 + $0x60] sm:$0xff]
    %v71 = vld [vmem:[%s1 + $0x68] sm:$0xff]
    %v72 = vld [vmem:[%s1 + $0x70] sm:$0xff]
    %v73 = vld [vmem:[%s1 + $0x78] sm:$0xff]
    %v74 = vld [vmem:[%s1 + $0x80] sm:$0xff]
    %v75 = vld [vmem:[%s1 + $0x88] sm:$0xff]
    %v76 = vld [vmem:[%s1 + $0x90] sm:$0xff]
    %v77 = vld [vmem:[%s1 + $0x98] sm:$0xff]
    %v78 = vld [vmem:[%s1 + $0xa0] sm:$0xff]
    %v79 = vld [vmem:[%s1 + $0xa8] sm:$0xff]
    %v80 = vld [vmem:[%s1 + $0xb0] sm:$0xff]
    %v81 = vld [vmem:[%s1 + $0xb8] sm:$0xff]
    %v82 = vld [vmem:[%s1 + $0xc0] sm:$0x33]
    %v83 = vld [vmem:[%s2] sm:$0x3]
    %v85 = vlaneseq
    %v86 = vshrl.u32 %v85, 7
    %v87 = vsub.s32 0, %v86
    %v88 = vrot.slane %v83, %v87
    %v89 = vlaneseq
    %v90 = vshrl.u32 %v89, 7
    %v91 = vsub.s32 1, %v90
    %v92 = vrot.slane %v83, %v91
    %v120 = vunpack.c.l.b16 %v58
    %v121 = vunpack.c.h.b16 %v58
    %v122 = vunpack.c.l.b16 %v59
    %v123 = vunpack.c.h.b16 %v59
    %v124 = vunpack.c.l.b16 %v60
    %v125 = vunpack.c.h.b16 %v60
    %v126 = vunpack.c.l.b16 %v61
    %v127 = vunpack.c.h.b16 %v61
    %v128 = vunpack.c.l.b16 %v62
    %v129 = vunpack.c.h.b16 %v62
    %v130 = vunpack.c.l.b16 %v63
    %v131 = vunpack.c.h.b16 %v63
    %v132 = vunpack.c.l.b16 %v64
    %v133 = vunpack.c.h.b16 %v64
    %v134 = vunpack.c.l.b16 %v65
    %v135 = vunpack.c.h.b16 %v65
    %v136 = vunpack.c.l.b16 %v66
    %v137 = vunpack.c.h.b16 %v66
    %v138 = vunpack.c.l.b16 %v67
    %v139 = vunpack.c.h.b16 %v67
    %v140 = vunpack.c.l.b16 %v68
    %v141 = vunpack.c.h.b16 %v68
    %v142 = vunpack.c.l.b16 %v69
    %v143 = vunpack.c.h.b16 %v69
    %v144 = vunpack.c.l.b16 %v70
    %v145 = vunpack.c.h.b16 %v70
    %v146 = vunpack.c.l.b16 %v71
    %v147 = vunpack.c.h.b16 %v71
    %v148 = vunpack.c.l.b16 %v72
    %v149 = vunpack.c.h.b16 %v72
    %v150 = vunpack.c.l.b16 %v73
    %v151 = vunpack.c.h.b16 %v73
    %v152 = vunpack.c.l.b16 %v74
    %v153 = vunpack.c.h.b16 %v74
    %v154 = vunpack.c.l.b16 %v75
    %v155 = vunpack.c.h.b16 %v75
    %v156 = vunpack.c.l.b16 %v76
    %v157 = vunpack.c.h.b16 %v76
    %v158 = vunpack.c.l.b16 %v77
    %v159 = vunpack.c.h.b16 %v77
    %v160 = vunpack.c.l.b16 %v78
    %v161 = vunpack.c.h.b16 %v78
    %v162 = vunpack.c.l.b16 %v79
    %v163 = vunpack.c.h.b16 %v79
    %v164 = vunpack.c.l.b16 %v80
    %v165 = vunpack.c.h.b16 %v80
    %v166 = vunpack.c.l.b16 %v81
    %v167 = vunpack.c.h.b16 %v81
    %v168 = vunpack.c.l.b16 %v82
    %v169 = vunpack.c.h.b16 %v82
    %v170 = vpack.c.b16 %v122, %v120
    %v171 = vpack.c.b16 %v123, %v121
    %v172 = vpack.c.b16 %v126, %v124
    %v173 = vpack.c.b16 %v127, %v125
    %v174 = vpack.c.b16 %v130, %v128
    %v175 = vpack.c.b16 %v131, %v129
    %v176 = vpack.c.b16 %v134, %v132
    %v177 = vpack.c.b16 %v135, %v133
    %v178 = vpack.c.b16 %v138, %v136
    %v179 = vpack.c.b16 %v139, %v137
    %v180 = vpack.c.b16 %v142, %v140
    %v181 = vpack.c.b16 %v143, %v141
    %v182 = vpack.c.b16 %v146, %v144
    %v183 = vpack.c.b16 %v147, %v145
    %v184 = vpack.c.b16 %v150, %v148
    %v185 = vpack.c.b16 %v151, %v149
    %v186 = vpack.c.b16 %v154, %v152
    %v187 = vpack.c.b16 %v155, %v153
    %v188 = vpack.c.b16 %v158, %v156
    %v189 = vpack.c.b16 %v159, %v157
    %v190 = vpack.c.b16 %v162, %v160
    %v191 = vpack.c.b16 %v163, %v161
    %v192 = vpack.c.b16 %v166, %v164
    %v193 = vpack.c.b16 %v167, %v165
    %v194 = vpack.c.b16 %v168, %v168
    %v195 = vpack.c.b16 %v169, %v169
    %vm220 = vcmask 556032
    %v222 = vsel %vm220, %v57, 0
    %vm224 = vcmask 1041408
    %v226 = vsel %vm224, %v194, 0
    %v229 = vsel %vm224, %v195, 0
    %231 = vmatprep.subr.bf16.mxu0 %v171
    %232 = vmatpush1.bf16.msra.mxu0 %v170
    %233 = vmatprep.subr.bf16.mxu0 %v173
    %234 = vmatpush1.bf16.msra.mxu0 %v172
    %235 = vmatprep.subr.bf16.mxu0 %v175
    %236 = vmatpush1.bf16.msra.mxu0 %v174
    %237 = vmatprep.subr.bf16.mxu0 %v177
    %238 = vmatpush1.bf16.msra.mxu0 %v176
    %239 = vmatprep.subr.bf16.mxu0 %v179
    %240 = vmatpush1.bf16.msra.mxu0 %v178
    %241 = vmatprep.subr.bf16.mxu0 %v181
    %242 = vmatpush1.bf16.msra.mxu0 %v180
    %243 = vmatprep.subr.bf16.mxu0 %v183
    %244 = vmatpush1.bf16.msra.mxu0 %v182
    %245 = vmatprep.subr.bf16.mxu0 %v185
    %246 = vmatpush1.bf16.msra.mxu0 %v184
    %247 = vmatprep.subr.bf16.mxu0 %v187
    %248 = vmatpush1.bf16.msra.mxu0 %v186
    %249 = vmatprep.subr.bf16.mxu0 %v189
    %250 = vmatpush1.bf16.msra.mxu0 %v188
    %251 = vmatprep.subr.bf16.mxu0 %v191
    %252 = vmatpush1.bf16.msra.mxu0 %v190
    %253 = vmatprep.subr.bf16.mxu0 %v193
    %254 = vmatpush1.bf16.msra.mxu0 %v192
    %255 = vmatprep.subr.bf16.mxu0 %v229
    %256 = vmatpush1.bf16.msra.mxu0 %v226
    %257 = vmatprep.subr.bf16.mxu0 0
    %258 = vmatpush1.bf16.msra.mxu0 0
    %259 = vmatprep.subr.bf16.mxu0 0
    %260 = vmatpush1.bf16.msra.mxu0 0
    %261 = vmatprep.subr.bf16.mxu0 0
    %262 = vmatpush1.bf16.msra.mxu0 0
    %263 = vmatprep.mubr.bf16.mxu0 %v222
    %264 = vmatmul.mubr.bf16.gmra.mrb[0].mxu0 %v56
    %v265 = vpop.f32.mrb[0].mxu0
    %v266 = vadd.f32 %v88, %v265
    %v267 = vpop.f32.mrb[0].mxu0
    %v268 = vadd.f32 %v92, %v267
    %v269 = vpop.f32.mrb[0].mxu0
    %v270 = vpop.f32.mrb[0].mxu0
    %271 = vdwg.mxu0
    %v272 = vmax.f32 %v266, 0.0
    %v273 = vmax.f32 %v268, 0.0
    %v274 = vpack.c.bf16 %v272, %v272
    %v275 = vpack.c.bf16 %v273, %v273
    %v276 = vld [vmem:[%s3] sm:$0xff]
    %v277 = vld [vmem:[%s3 + $0x8] sm:$0xff]
    %v278 = vld [vmem:[%s3 + $0x10] sm:$0xff]
    %v279 = vld [vmem:[%s3 + $0x18] sm:$0xff]
    %v280 = vld [vmem:[%s3 + $0x20] sm:$0xff]
    %v281 = vld [vmem:[%s3 + $0x28] sm:$0xff]
    %v282 = vld [vmem:[%s3 + $0x30] sm:$0xff]
    %v283 = vld [vmem:[%s3 + $0x38] sm:$0xff]
    %v284 = vld [vmem:[%s3 + $0x40] sm:$0xff]
    %v285 = vld [vmem:[%s3 + $0x48] sm:$0xff]
    %v286 = vld [vmem:[%s3 + $0x50] sm:$0xff]
    %v287 = vld [vmem:[%s3 + $0x58] sm:$0xff]
    %v288 = vld [vmem:[%s3 + $0x60] sm:$0xff]
    %v289 = vld [vmem:[%s3 + $0x68] sm:$0xff]
    %v290 = vld [vmem:[%s3 + $0x70] sm:$0xff]
    %v291 = vld [vmem:[%s3 + $0x78] sm:$0xff]
    %v292 = vld [vmem:[%s3 + $0x80] sm:$0xff]
    %v293 = vld [vmem:[%s3 + $0x88] sm:$0xff]
    %v294 = vld [vmem:[%s3 + $0x90] sm:$0xff]
    %v295 = vld [vmem:[%s3 + $0x98] sm:$0xff]
    %v296 = vld [vmem:[%s3 + $0xa0] sm:$0xff]
    %v297 = vld [vmem:[%s3 + $0xa8] sm:$0xff]
    %v298 = vld [vmem:[%s3 + $0xb0] sm:$0xff]
    %v299 = vld [vmem:[%s3 + $0xb8] sm:$0xff]
    %v300 = vld [vmem:[%s3 + $0xc0] sm:$0xff]
    %v301 = vld [vmem:[%s3 + $0xc8] sm:$0xff]
    %v302 = vld [vmem:[%s3 + $0xd0] sm:$0xff]
    %v303 = vld [vmem:[%s3 + $0xd8] sm:$0xff]
    %v304 = vld [vmem:[%s3 + $0xe0] sm:$0xff]
    %v305 = vld [vmem:[%s3 + $0xe8] sm:$0xff]
    %v306 = vld [vmem:[%s3 + $0xf0] sm:$0xff]
    %v307 = vld [vmem:[%s3 + $0xf8] sm:$0xff]
    %v308 = vld [vmem:[%s4] sm:$0x3]
    %v310 = vlaneseq
    %v311 = vshrl.u32 %v310, 7
    %v312 = vsub.s32 0, %v311
    %v313 = vrot.slane %v308, %v312
    %v314 = vlaneseq
    %v315 = vshrl.u32 %v314, 7
    %v316 = vsub.s32 1, %v315
    %v317 = vrot.slane %v308, %v316
    %v352 = vunpack.c.l.b16 %v276
    %v353 = vunpack.c.h.b16 %v276
    %v354 = vunpack.c.l.b16 %v277
    %v355 = vunpack.c.h.b16 %v277
    %v356 = vunpack.c.l.b16 %v278
    %v357 = vunpack.c.h.b16 %v278
    %v358 = vunpack.c.l.b16 %v279
    %v359 = vunpack.c.h.b16 %v279
    %v360 = vunpack.c.l.b16 %v280
    %v361 = vunpack.c.h.b16 %v280
    %v362 = vunpack.c.l.b16 %v281
    %v363 = vunpack.c.h.b16 %v281
    %v364 = vunpack.c.l.b16 %v282
    %v365 = vunpack.c.h.b16 %v282
    %v366 = vunpack.c.l.b16 %v283
    %v367 = vunpack.c.h.b16 %v283
    %v368 = vunpack.c.l.b16 %v284
    %v369 = vunpack.c.h.b16 %v284
    %v370 = vunpack.c.l.b16 %v285
    %v371 = vunpack.c.h.b16 %v285
    %v372 = vunpack.c.l.b16 %v286
    %v373 = vunpack.c.h.b16 %v286
    %v374 = vunpack.c.l.b16 %v287
    %v375 = vunpack.c.h.b16 %v287
    %v376 = vunpack.c.l.b16 %v288
    %v377 = vunpack.c.h.b16 %v288
    %v378 = vunpack.c.l.b16 %v289
    %v379 = vunpack.c.h.b16 %v289
    %v380 = vunpack.c.l.b16 %v290
    %v381 = vunpack.c.h.b16 %v290
    %v382 = vunpack.c.l.b16 %v291
    %v383 = vunpack.c.h.b16 %v291
    %v384 = vunpack.c.l.b16 %v292
    %v385 = vunpack.c.h.b16 %v292
    %v386 = vunpack.c.l.b16 %v293
    %v387 = vunpack.c.h.b16 %v293
    %v388 = vunpack.c.l.b16 %v294
    %v389 = vunpack.c.h.b16 %v294
    %v390 = vunpack.c.l.b16 %v295
    %v391 = vunpack.c.h.b16 %v295
    %v392 = vunpack.c.l.b16 %v296
    %v393 = vunpack.c.h.b16 %v296
    %v394 = vunpack.c.l.b16 %v297
    %v395 = vunpack.c.h.b16 %v297
    %v396 = vunpack.c.l.b16 %v298
    %v397 = vunpack.c.h.b16 %v298
    %v398 = vunpack.c.l.b16 %v299
    %v399 = vunpack.c.h.b16 %v299
    %v400 = vunpack.c.l.b16 %v300
    %v401 = vunpack.c.h.b16 %v300
    %v402 = vunpack.c.l.b16 %v301
    %v403 = vunpack.c.h.b16 %v301
    %v404 = vunpack.c.l.b16 %v302
    %v405 = vunpack.c.h.b16 %v302
    %v406 = vunpack.c.l.b16 %v303
    %v407 = vunpack.c.h.b16 %v303
    %v408 = vunpack.c.l.b16 %v304
    %v409 = vunpack.c.h.b16 %v304
    %v410 = vunpack.c.l.b16 %v305
    %v411 = vunpack.c.h.b16 %v305
    %v412 = vunpack.c.l.b16 %v306
    %v413 = vunpack.c.h.b16 %v306
    %v414 = vunpack.c.l.b16 %v307
    %v415 = vunpack.c.h.b16 %v307
    %v416 = vpack.c.b16 %v354, %v352
    %v417 = vpack.c.b16 %v355, %v353
    %v418 = vpack.c.b16 %v358, %v356
    %v419 = vpack.c.b16 %v359, %v357
    %v420 = vpack.c.b16 %v362, %v360
    %v421 = vpack.c.b16 %v363, %v361
    %v422 = vpack.c.b16 %v366, %v364
    %v423 = vpack.c.b16 %v367, %v365
    %v424 = vpack.c.b16 %v370, %v368
    %v425 = vpack.c.b16 %v371, %v369
    %v426 = vpack.c.b16 %v374, %v372
    %v427 = vpack.c.b16 %v375, %v373
    %v428 = vpack.c.b16 %v378, %v376
    %v429 = vpack.c.b16 %v379, %v377
    %v430 = vpack.c.b16 %v382, %v380
    %v431 = vpack.c.b16 %v383, %v381
    %v432 = vpack.c.b16 %v386, %v384
    %v433 = vpack.c.b16 %v387, %v385
    %v434 = vpack.c.b16 %v390, %v388
    %v435 = vpack.c.b16 %v391, %v389
    %v436 = vpack.c.b16 %v394, %v392
    %v437 = vpack.c.b16 %v395, %v393
    %v438 = vpack.c.b16 %v398, %v396
    %v439 = vpack.c.b16 %v399, %v397
    %v440 = vpack.c.b16 %v402, %v400
    %v441 = vpack.c.b16 %v403, %v401
    %v442 = vpack.c.b16 %v406, %v404
    %v443 = vpack.c.b16 %v407, %v405
    %v444 = vpack.c.b16 %v410, %v408
    %v445 = vpack.c.b16 %v411, %v409
    %v446 = vpack.c.b16 %v414, %v412
    %v447 = vpack.c.b16 %v415, %v413
    %480 = vmatprep.subr.bf16.mxu0 %v417
    %481 = vmatpush1.bf16.msra.mxu0 %v416
    %482 = vmatprep.subr.bf16.mxu0 %v419
    %483 = vmatpush1.bf16.msra.mxu0 %v418
    %484 = vmatprep.subr.bf16.mxu0 %v421
    %485 = vmatpush1.bf16.msra.mxu0 %v420
    %486 = vmatprep.subr.bf16.mxu0 %v423
    %487 = vmatpush1.bf16.msra.mxu0 %v422
    %488 = vmatprep.subr.bf16.mxu0 %v425
    %489 = vmatpush1.bf16.msra.mxu0 %v424
    %490 = vmatprep.subr.bf16.mxu0 %v427
    %491 = vmatpush1.bf16.msra.mxu0 %v426
    %492 = vmatprep.subr.bf16.mxu0 %v429
    %493 = vmatpush1.bf16.msra.mxu0 %v428
    %494 = vmatprep.subr.bf16.mxu0 %v431
    %495 = vmatpush1.bf16.msra.mxu0 %v430
    %496 = vmatprep.subr.bf16.mxu0 %v433
    %497 = vmatpush1.bf16.msra.mxu0 %v432
    %498 = vmatprep.subr.bf16.mxu0 %v435
    %499 = vmatpush1.bf16.msra.mxu0 %v434
    %500 = vmatprep.subr.bf16.mxu0 %v437
    %501 = vmatpush1.bf16.msra.mxu0 %v436
    %502 = vmatprep.subr.bf16.mxu0 %v439
    %503 = vmatpush1.bf16.msra.mxu0 %v438
    %504 = vmatprep.subr.bf16.mxu0 %v441
    %505 = vmatpush1.bf16.msra.mxu0 %v440
    %506 = vmatprep.subr.bf16.mxu0 %v443
    %507 = vmatpush1.bf16.msra.mxu0 %v442
    %508 = vmatprep.subr.bf16.mxu0 %v445
    %509 = vmatpush1.bf16.msra.mxu0 %v444
    %510 = vmatprep.subr.bf16.mxu0 %v447
    %511 = vmatpush1.bf16.msra.mxu0 %v446
    %512 = vmatprep.mubr.bf16.mxu0 %v275
    %513 = vmatmul.mubr.bf16.gmra.mrb[0].mxu0 %v274
    %v514 = vpop.f32.mrb[0].mxu0
    %v515 = vadd.f32 %v313, %v514
    %v516 = vpop.f32.mrb[0].mxu0
    %v517 = vadd.f32 %v317, %v516
    %v518 = vpop.f32.mrb[0].mxu0
    %v519 = vpop.f32.mrb[0].mxu0
    %520 = vdwg.mxu0
    %v521 = vmax.f32 %v515, 0.0
    %v522 = vmax.f32 %v517, 0.0
    %v523 = vpack.c.bf16 %v521, %v521
    %v524 = vpack.c.bf16 %v522, %v522
    %v525 = vld [vmem:[%s5] sm:$0xf]
    %v526 = vld [vmem:[%s5 + $0x4] sm:$0xf]
    %v527 = vld [vmem:[%s5 + $0x8] sm:$0xf]
    %v528 = vld [vmem:[%s5 + $0xc] sm:$0xf]
    %v529 = vld [vmem:[%s5 + $0x10] sm:$0xf]
    %v530 = vld [vmem:[%s5 + $0x14] sm:$0xf]
    %v531 = vld [vmem:[%s5 + $0x18] sm:$0xf]
    %v532 = vld [vmem:[%s5 + $0x1c] sm:$0xf]
    %v533 = vld [vmem:[%s5 + $0x20] sm:$0xf]
    %v534 = vld [vmem:[%s5 + $0x24] sm:$0xf]
    %v535 = vld [vmem:[%s5 + $0x28] sm:$0xf]
    %v536 = vld [vmem:[%s5 + $0x2c] sm:$0xf]
    %v537 = vld [vmem:[%s5 + $0x30] sm:$0xf]
    %v538 = vld [vmem:[%s5 + $0x34] sm:$0xf]
    %v539 = vld [vmem:[%s5 + $0x38] sm:$0xf]
    %v540 = vld [vmem:[%s5 + $0x3c] sm:$0xf]
    %v541 = vld [vmem:[%s5 + $0x40] sm:$0xf]
    %v542 = vld [vmem:[%s5 + $0x44] sm:$0xf]
    %v543 = vld [vmem:[%s5 + $0x48] sm:$0xf]
    %v544 = vld [vmem:[%s5 + $0x4c] sm:$0xf]
    %v545 = vld [vmem:[%s5 + $0x50] sm:$0xf]
    %v546 = vld [vmem:[%s5 + $0x54] sm:$0xf]
    %v547 = vld [vmem:[%s5 + $0x58] sm:$0xf]
    %v548 = vld [vmem:[%s5 + $0x5c] sm:$0xf]
    %v549 = vld [vmem:[%s5 + $0x60] sm:$0xf]
    %v550 = vld [vmem:[%s5 + $0x64] sm:$0xf]
    %v551 = vld [vmem:[%s5 + $0x68] sm:$0xf]
    %v552 = vld [vmem:[%s5 + $0x6c] sm:$0xf]
    %v553 = vld [vmem:[%s5 + $0x70] sm:$0xf]
    %v554 = vld [vmem:[%s5 + $0x74] sm:$0xf]
    %v555 = vld [vmem:[%s5 + $0x78] sm:$0xf]
    %v556 = vld [vmem:[%s5 + $0x7c] sm:$0xf]
    %v557 = vld [vmem:[%s6] sm:$0x1]
    %v559 = vlaneseq
    %v560 = vshrl.u32 %v559, 7
    %v561 = vsub.s32 0, %v560
    %v562 = vrot.slane %v557, %v561
    %v596 = vunpack.c.l.b16 %v525
    %v597 = vunpack.c.l.b16 %v526
    %v598 = vunpack.c.l.b16 %v527
    %v599 = vunpack.c.l.b16 %v528
    %v600 = vunpack.c.l.b16 %v529
    %v601 = vunpack.c.l.b16 %v530
    %v602 = vunpack.c.l.b16 %v531
    %v603 = vunpack.c.l.b16 %v532
    %v604 = vunpack.c.l.b16 %v533
    %v605 = vunpack.c.l.b16 %v534
    %v606 = vunpack.c.l.b16 %v535
    %v607 = vunpack.c.l.b16 %v536
    %v608 = vunpack.c.l.b16 %v537
    %v609 = vunpack.c.l.b16 %v538
    %v610 = vunpack.c.l.b16 %v539
    %v611 = vunpack.c.l.b16 %v540
    %v612 = vunpack.c.l.b16 %v541
    %v613 = vunpack.c.l.b16 %v542
    %v614 = vunpack.c.l.b16 %v543
    %v615 = vunpack.c.l.b16 %v544
    %v616 = vunpack.c.l.b16 %v545
    %v617 = vunpack.c.l.b16 %v546
    %v618 = vunpack.c.l.b16 %v547
    %v619 = vunpack.c.l.b16 %v548
    %v620 = vunpack.c.l.b16 %v549
    %v621 = vunpack.c.l.b16 %v550
    %v622 = vunpack.c.l.b16 %v551
    %v623 = vunpack.c.l.b16 %v552
    %v624 = vunpack.c.l.b16 %v553
    %v625 = vunpack.c.l.b16 %v554
    %v626 = vunpack.c.l.b16 %v555
    %v627 = vunpack.c.l.b16 %v556
    %v628 = vpack.c.b16 %v597, %v596
    %v629 = vpack.c.b16 %v599, %v598
    %v630 = vpack.c.b16 %v601, %v600
    %v631 = vpack.c.b16 %v603, %v602
    %v632 = vpack.c.b16 %v605, %v604
    %v633 = vpack.c.b16 %v607, %v606
    %v634 = vpack.c.b16 %v609, %v608
    %v635 = vpack.c.b16 %v611, %v610
    %v636 = vpack.c.b16 %v613, %v612
    %v637 = vpack.c.b16 %v615, %v614
    %v638 = vpack.c.b16 %v617, %v616
    %v639 = vpack.c.b16 %v619, %v618
    %v640 = vpack.c.b16 %v621, %v620
    %v641 = vpack.c.b16 %v623, %v622
    %v642 = vpack.c.b16 %v625, %v624
    %v643 = vpack.c.b16 %v627, %v626
    %660 = vmatprep.subr.bf16.mxu0 0
    %661 = vmatpush1.bf16.msra.mxu0 %v628
    %662 = vmatprep.subr.bf16.mxu0 0
    %663 = vmatpush1.bf16.msra.mxu0 %v629
    %664 = vmatprep.subr.bf16.mxu0 0
    %665 = vmatpush1.bf16.msra.mxu0 %v630
    %666 = vmatprep.subr.bf16.mxu0 0
    %667 = vmatpush1.bf16.msra.mxu0 %v631
    %668 = vmatprep.subr.bf16.mxu0 0
    %669 = vmatpush1.bf16.msra.mxu0 %v632
    %670 = vmatprep.subr.bf16.mxu0 0
    %671 = vmatpush1.bf16.msra.mxu0 %v633
    %672 = vmatprep.subr.bf16.mxu0 0
    %673 = vmatpush1.bf16.msra.mxu0 %v634
    %674 = vmatprep.subr.bf16.mxu0 0
    %675 = vmatpush1.bf16.msra.mxu0 %v635
    %676 = vmatprep.subr.bf16.mxu0 0
    %677 = vmatpush1.bf16.msra.mxu0 %v636
    %678 = vmatprep.subr.bf16.mxu0 0
    %679 = vmatpush1.bf16.msra.mxu0 %v637
    %680 = vmatprep.subr.bf16.mxu0 0
    %681 = vmatpush1.bf16.msra.mxu0 %v638
    %682 = vmatprep.subr.bf16.mxu0 0
    %683 = vmatpush1.bf16.msra.mxu0 %v639
    %684 = vmatprep.subr.bf16.mxu0 0
    %685 = vmatpush1.bf16.msra.mxu0 %v640
    %686 = vmatprep.subr.bf16.mxu0 0
    %687 = vmatpush1.bf16.msra.mxu0 %v641
    %688 = vmatprep.subr.bf16.mxu0 0
    %689 = vmatpush1.bf16.msra.mxu0 %v642
    %690 = vmatprep.subr.bf16.mxu0 0
    %691 = vmatpush1.bf16.msra.mxu0 %v643
    %692 = vmatprep.mubr.bf16.mxu0 %v524
    %693 = vmatmul.mubr.bf16.gmra.mrb[0].mxu0 %v523
    %v694 = vpop.f32.mrb[0].mxu0
    %v695 = vadd.f32 %v562, %v694
    %v696 = vpop.f32.mrb[0].mxu0
    %v697 = vpop.f32.mrb[0].mxu0
    %v698 = vpop.f32.mrb[0].mxu0
    %699 = vdwg.mxu0
    %v700 = vmax.f32 %v695, 0.0
    %701 = vst [vmem:[#allocation2] sm:$0xff] %v700
    // Predicated region
    $region30: #{seq_neural_network_forward.1} parent=1 // pred_check
      _
    $region31: #{seq_neural_network_forward.1} parent=1 // pred_check_branch
      %703 = sbr.rel (0) target = $region33
    $region32: #{seq_neural_network_forward.1} parent=1 // pred_region
      %s705 = ssub.s32 128, 32
      %706 = vsyncadd [#allocation3], %s705
      %s707 = sshll.u32 [#allocation2], 4
      %s708 = int_to_ptr.vmem [resolvable:$true] %s707
      %713 = dma.vmem_to_hbm [thread:$0]  %s708, 32, %s7, [#allocation3], 32, 32, 2
    $region33: #{seq_neural_network_forward.1} parent=1 // pred_fallthru
      _
    // Predicated region
    $region34: #{seq_neural_network_forward.1} parent=1 // pred_check
      _
    $region35: #{seq_neural_network_forward.1} parent=1 // pred_check_branch
      %715 = sbr.rel (0) target = $region37
    $region36: #{seq_neural_network_forward.1} parent=1 // pred_region
      %716 = dma.done [#allocation3], 128
    $region37: #{seq_neural_network_forward.1} parent=1 // pred_fallthru
      _
    %717 = vsyncpa [#allocation3], 1

</llo_original>
